<compile_context>
chip_gen: v6e
topology: v6e:2x2x1
jax: 0.10.0
libtpu: 0.0.40
codegen_flags: <defaults>
</compile_context>

<pallas_src>
import jax
import jax.numpy as jnp
from jax import lax
from jax.experimental import pallas as pl
from jax.experimental.pallas import tpu as pltpu

_LANE = 128      # TPU lane width
_SUBLANE = 8     # TPU sublane width (f32)


def _gelu_exact(x):
    # PyTorch nn.GELU default = exact erf formulation.
    return 0.5 * x * (1.0 + lax.erf(x * 0.7071067811865476))


def _round_up(n, m):
    return ((n + m - 1) // m) * m


def decoder_kernel(z_ref, w1_ref, b1_ref, w2_ref, b2_ref, o_ref):
    # Fused MLP on one (tm, *) batch tile: matmul -> bias -> GELU -> matmul -> bias.
    z = z_ref[...]
    h = jnp.dot(z, w1_ref[...], preferred_element_type=jnp.float32)
    h = _gelu_exact(h + b1_ref[...])                 # (tm, hp) + (1, hp)
    out = jnp.dot(h.astype(w2_ref.dtype), w2_ref[...],
                  preferred_element_type=jnp.float32)
    out = out + b2_ref[...]                          # (tm, op) + (1, op)
    o_ref[...] = out.astype(o_ref.dtype)


def decoder_forward(z, w1, b1, w2, b2, *, tm=512):
    """Decoder forward.

    z : (N, z_dim)
    w1: (z_dim, h_dim)   -- pre-transposed PyTorch weight (W1.T)
    b1: (h_dim,)
    w2: (h_dim, out_dim) -- pre-transposed PyTorch weight (W2.T)
    b2: (out_dim,)
    returns (N, out_dim)
    """
    N, z_dim = z.shape
    h_dim = w1.shape[1]
    out_dim = w2.shape[1]
    dtype = z.dtype

    # ---- lane-dense feature padding (multiples of 128) --------------------
    zp = _round_up(z_dim, _LANE)
    hp = _round_up(h_dim, _LANE)
    op = _round_up(out_dim, _LANE)

    # ---- batch tiling: big tiles, but keep >=2 grid steps for v7x --------
    n8 = _round_up(N, _SUBLANE)
    tm = min(tm, n8)
    if n8 // tm < 2:
        tm = max(_SUBLANE, _round_up((n8 + 1) // 2, _SUBLANE))
    n_pad = _round_up(n8, tm)
    grid = (n_pad // tm,)

    # ---- zero-pad operands (zero rows/cols don't change the result) ------
    z_p = jnp.zeros((n_pad, zp), dtype).at[:N, :z_dim].set(z)
    w1_p = jnp.zeros((zp, hp), dtype).at[:z_dim, :h_dim].set(w1)
    b1_p = jnp.zeros((1, hp), dtype).at[0, :h_dim].set(b1.reshape(-1))
    w2_p = jnp.zeros((hp, op), dtype).at[:h_dim, :out_dim].set(w2)
    b2_p = jnp.zeros((1, op), dtype).at[0, :out_dim].set(b2.reshape(-1))

    cost = pl.CostEstimate(
        flops=2 * n_pad * (zp * hp + hp * op),
        transcendentals=n_pad * hp,                     # erf in the GELU
        bytes_accessed=4 * (n_pad * zp + zp * hp + hp + hp * op + op + n_pad * op),
    )

    out_p = pl.pallas_call(
        decoder_kernel,
        out_shape=jax.ShapeDtypeStruct((n_pad, op), dtype),
        grid_spec=pltpu.PrefetchScalarGridSpec(
            num_scalar_prefetch=0,
            grid=grid,
            in_specs=[
                pl.BlockSpec((tm, zp), lambda i: (i, 0)),     # Z tile
                pl.BlockSpec((zp, hp), lambda i: (0, 0)),     # W1 (grid-invariant)
                pl.BlockSpec((1, hp), lambda i: (0, 0)),      # b1
                pl.BlockSpec((hp, op), lambda i: (0, 0)),     # W2 (grid-invariant)
                pl.BlockSpec((1, op), lambda i: (0, 0)),      # b2
            ],
            out_specs=pl.BlockSpec((tm, op), lambda i: (i, 0)),
        ),
        compiler_params=pltpu.CompilerParams(
            dimension_semantics=("parallel",),
            vmem_limit_bytes=64 * 1024 * 1024,
        ),
        cost_estimate=cost,
    )(z_p, w1_p, b1_p, w2_p, b2_p)

    return out_p[:N, :out_dim]


def init_decoder_params(key, z_dim, out_dim, h_dim=256, dtype=jnp.float32):
    """Deterministic synthetic init (Kaiming-uniform-ish like nn.Linear),
    stored pre-transposed as (in, out)."""
    k1, k2, k3, k4 = jax.random.split(key, 4)
    lim1 = 1.0 / jnp.sqrt(z_dim)
    lim2 = 1.0 / jnp.sqrt(h_dim)
    w1 = jax.random.uniform(k1, (z_dim, h_dim), dtype, -lim1, lim1)
    b1 = jax.random.uniform(k2, (h_dim,), dtype, -lim1, lim1)
    w2 = jax.random.uniform(k3, (h_dim, out_dim), dtype, -lim2, lim2)
    b2 = jax.random.uniform(k4, (out_dim,), dtype, -lim2, lim2)
    return w1, b1, w2, b2


def decoder_reference(z, w1, b1, w2, b2):
    # Pure-JAX reference in full f32 precision (Decoder: single GELU, no final act).
    h = _gelu_exact(jnp.dot(z, w1, precision=lax.Precision.HIGHEST) + b1)
    return jnp.dot(h, w2, precision=lax.Precision.HIGHEST) + b2


if __name__ == "__main__":
    # Small shapes consistent with the module: h_dim=256 is the Decoder default.
    batch, z_dim, h_dim, out_dim = 256, 16, 256, 32

    key = jax.random.PRNGKey(0)
    kz, kp = jax.random.split(key)
    Z = jax.random.normal(kz, (batch, z_dim), dtype=jnp.float32)
    w1, b1, w2, b2 = init_decoder_params(kp, z_dim, out_dim, h_dim)

    out = decoder_forward(Z, w1, b1, w2, b2)
    out = jax.block_until_ready(out)

    out_ref = decoder_reference(Z, w1, b1, w2, b2)
    assert out.shape == (batch, out_dim)
    assert jnp.allclose(out, out_ref, atol=1e-4, rtol=1e-4), (
        float(jnp.max(jnp.abs(out - out_ref))))

    print("KERNEL_OK")
</pallas_src>

<mosaic_0001>
module attributes {stable_mosaic.version = 11 : i64} {
  func.func @decoder_kernel(%arg0: i32, %arg1: memref<128x128xf32, #tpu.memory_space<vmem>>, %arg2: memref<128x256xf32, #tpu.memory_space<vmem>>, %arg3: memref<1x256xf32, #tpu.memory_space<vmem>>, %arg4: memref<256x128xf32, #tpu.memory_space<vmem>>, %arg5: memref<1x128xf32, #tpu.memory_space<vmem>>, %arg6: memref<128x128xf32, #tpu.memory_space<vmem>>) attributes {dimension_semantics = [#tpu.dimension_semantics<parallel>], iteration_bounds = array<i64: 2>, scalar_prefetch = 0 : i64, scratch_operands = 0 : i64, tpu.core_type = #tpu.core_type<tc>, window_params = [{transform_indices = @transform_0, window_bounds = array<i64: 128, 128>}, {pipeline_mode = #tpu.pipeline_mode<synchronous>, transform_indices = @transform_1, window_bounds = array<i64: 128, 256>}, {pipeline_mode = #tpu.pipeline_mode<synchronous>, transform_indices = @transform_2, window_bounds = array<i64: 1, 256>}, {pipeline_mode = #tpu.pipeline_mode<synchronous>, transform_indices = @transform_3, window_bounds = array<i64: 256, 128>}, {pipeline_mode = #tpu.pipeline_mode<synchronous>, transform_indices = @transform_4, window_bounds = array<i64: 1, 128>}, {transform_indices = @transform_5, window_bounds = array<i64: 128, 128>}]} {
    %c0 = arith.constant 0 : index
    %c0_0 = arith.constant 0 : index
    %0 = vector.load %arg1[%c0, %c0_0] : memref<128x128xf32, #tpu.memory_space<vmem>>, vector<128x128xf32>
    %c0_1 = arith.constant 0 : index
    %c0_2 = arith.constant 0 : index
    %1 = vector.load %arg2[%c0_1, %c0_2] : memref<128x256xf32, #tpu.memory_space<vmem>>, vector<128x256xf32>
    %cst = arith.constant dense<0.000000e+00> : vector<128x256xf32>
    %2 = tpu.matmul %0, %1, %cst {dimension_numbers = #tpu.dot_dimension_numbers<[1], [0], [0], [1], [0, 0, 1, 1], [], []>} : vector<128x128xf32>, vector<128x256xf32>, vector<128x256xf32> -> vector<128x256xf32>
    %c0_3 = arith.constant 0 : index
    %c0_4 = arith.constant 0 : index
    %3 = vector.load %arg3[%c0_3, %c0_4] : memref<1x256xf32, #tpu.memory_space<vmem>>, vector<1x256xf32>
    %4 = vector.broadcast %3 : vector<1x256xf32> to vector<128x256xf32>
    %5 = arith.addf %2, %4 : vector<128x256xf32>
    %cst_5 = arith.constant 5.000000e-01 : f32
    %6 = vector.broadcast %cst_5 : f32 to vector<128x256xf32>
    %7 = arith.mulf %6, %5 : vector<128x256xf32>
    %cst_6 = arith.constant 0.707106769 : f32
    %8 = vector.broadcast %cst_6 : f32 to vector<128x256xf32>
    %9 = arith.mulf %5, %8 : vector<128x256xf32>
    %10 = math.erf %9 : vector<128x256xf32>
    %cst_7 = arith.constant 1.000000e+00 : f32
    %11 = vector.broadcast %cst_7 : f32 to vector<128x256xf32>
    %12 = arith.addf %11, %10 : vector<128x256xf32>
    %13 = arith.mulf %7, %12 : vector<128x256xf32>
    %c0_8 = arith.constant 0 : index
    %c0_9 = arith.constant 0 : index
    %14 = vector.load %arg4[%c0_8, %c0_9] : memref<256x128xf32, #tpu.memory_space<vmem>>, vector<256x128xf32>
    %cst_10 = arith.constant dense<0.000000e+00> : vector<128x128xf32>
    %15 = tpu.matmul %13, %14, %cst_10 {dimension_numbers = #tpu.dot_dimension_numbers<[1], [0], [0], [1], [0, 0, 1, 1], [], []>} : vector<128x256xf32>, vector<256x128xf32>, vector<128x128xf32> -> vector<128x128xf32>
    %c0_11 = arith.constant 0 : index
    %c0_12 = arith.constant 0 : index
    %16 = vector.load %arg5[%c0_11, %c0_12] : memref<1x128xf32, #tpu.memory_space<vmem>>, vector<1x128xf32>
    %17 = vector.broadcast %16 : vector<1x128xf32> to vector<128x128xf32>
    %18 = arith.addf %15, %17 : vector<128x128xf32>
    %c0_13 = arith.constant 0 : index
    %c0_14 = arith.constant 0 : index
    %19 = vector.load %arg6[%c0_13, %c0_14] : memref<128x128xf32, #tpu.memory_space<vmem>>, vector<128x128xf32>
    tpu.vector_store %arg6[%c0_13, %c0_14], %18 {strides = array<i32>} : memref<128x128xf32, #tpu.memory_space<vmem>>, vector<128x128xf32>,
    return
  }
  func.func @transform_0(%arg0: i32) -> (i32, i32) {
    %c0_i32 = arith.constant 0 : i32
    %c0_i32_0 = arith.constant 0 : i32
    return %arg0, %c0_i32 : i32, i32
  }
  func.func @transform_1(%arg0: i32) -> (i32, i32) {
    %c0_i32 = arith.constant 0 : i32
    %c0_i32_0 = arith.constant 0 : i32
    %c0_i32_1 = arith.constant 0 : i32
    return %c0_i32, %c0_i32_0 : i32, i32
  }
  func.func @transform_2(%arg0: i32) -> (i32, i32) {
    %c0_i32 = arith.constant 0 : i32
    %c0_i32_0 = arith.constant 0 : i32
    %c0_i32_1 = arith.constant 0 : i32
    return %c0_i32, %c0_i32_0 : i32, i32
  }
  func.func @transform_3(%arg0: i32) -> (i32, i32) {
    %c0_i32 = arith.constant 0 : i32
    %c0_i32_0 = arith.constant 0 : i32
    %c0_i32_1 = arith.constant 0 : i32
    return %c0_i32, %c0_i32_0 : i32, i32
  }
  func.func @transform_4(%arg0: i32) -> (i32, i32) {
    %c0_i32 = arith.constant 0 : i32
    %c0_i32_0 = arith.constant 0 : i32
    %c0_i32_1 = arith.constant 0 : i32
    return %c0_i32, %c0_i32_0 : i32, i32
  }
  func.func @transform_5(%arg0: i32) -> (i32, i32) {
    %c0_i32 = arith.constant 0 : i32
    %c0_i32_0 = arith.constant 0 : i32
    return %arg0, %c0_i32 : i32, i32
  }
}

</mosaic_0001>

<llo_original>
// kernel: tpu_custom_call.1
$region0: #{tpu_custom_call.1}
  #allocation0 [shape = 'u32[]', space=smem, size = 0x4, offset = 0x4, fixed_abs, tag = 'smem constant byte address 0x4 - core index']
  #allocation1 [shape = 'u32[144,128]{1,0:T(1,128)}', space=vmem, size = 0x12000, scoped, tag = 'internal scratch']
  %s0 = inlined_call_operand.hbm [shape: f32[256,128], index: 0, kind: input, shape index: {}]
  %s1 = inlined_call_operand.hbm [shape: f32[128,256], index: 1, kind: input, shape index: {}]
  %s2 = inlined_call_operand.vmem [shape: f32[1,256], index: 2, kind: input, shape index: {}]
  %s3 = inlined_call_operand.hbm [shape: f32[256,128], index: 3, kind: input, shape index: {}]
  %s4 = inlined_call_operand.vmem [shape: f32[1,128], index: 4, kind: input, shape index: {}]
  %s5 = inlined_call_operand.hbm [shape: f32[256,128], index: 5, kind: output, shape index: {}]
  %s6 = sld [smem:[#allocation0]]
  $region65: #{tpu_custom_call.1} parent=0
    _
  %s8 = ssub.s32 1, %s6
  %s9 = scalar_select 0, %s8, %s6
  $region1: #{tpu_custom_call.1} parent=0
    #allocation2 [shape = 'u8[131072]{0}', space=vmem, size = 0x20000, scoped, tag = 'input window, operand 0']
    #allocation3 [shape = 's32[2]{0}', space=sflag, size = 0x8, scoped, tag = 'scoped memory for tpu_custom_call.1']
    #allocation4 [shape = 's32[2]{0}', space=sflag, size = 0x8, scoped, tag = 'scoped memory for tpu_custom_call.1']
    #allocation5 [shape = 'u8[131072]{0}', space=vmem, size = 0x20000, scoped, tag = 'input window, operand 1, single buffered']
    #allocation6 [shape = 's32[1]{0}', space=sflag, size = 0x4, scoped, tag = 'scoped memory for tpu_custom_call.1']
    #allocation7 [shape = 'u8[131072]{0}', space=vmem, size = 0x20000, scoped, tag = 'input window, operand 3, single buffered']
    #allocation8 [shape = 'u8[131072]{0}', space=vmem, size = 0x20000, scoped, tag = 'output window, operand 0']
    %10 = vsyncpa [#allocation3], 0
    %s11 = scalar_lea.sflag [#allocation3], 1
    %12 = vsyncpa %s11, 0
    %13 = vsyncpa [#allocation6], 0
    %14 = vsyncpa [#allocation4], 0
    %s15 = scalar_lea.sflag [#allocation4], 1
    %16 = vsyncpa %s15, 0
    loop: start=0, step=1, limit=4
    $region2: #{tpu_custom_call.1} parent=1 // loop_pre_header
      _
    $region3: #{tpu_custom_call.1} parent=1 // loop_header
      %s18 = sphi 0, %s22
      %p19 = scmp.ge.s32.totalorder %s18, 4
      %s28 = sphi 0, %s30
      %s31 = sphi 0, %s28
      %s32 = sphi 0, %s31
      %s48 = sphi 0, %s32
      %s52 = sphi 0, %s52
      %s54 = sphi 0, %s52
      %s55 = sphi 0, %s54
      %s69 = sphi 0, %s55
      %s73 = sphi 0, %s73
      %s75 = sphi 0, %s73
      %s76 = sphi 0, %s75
      %s90 = sphi 0, %s76
      %s94 = sphi 0, %s94
      %s96 = sphi 0, %s94
      %s97 = sphi 0, %s96
      %s111 = sphi 0, %s97
      %s115 = sphi 0, %s115
      %s117 = sphi 0, %s115
      %s118 = sphi 0, %s117
      %s132 = sphi 0, %s118
      %s138 = sphi 0, %s140
      %s141 = sphi 0, %s138
      %s142 = sphi 0, %s141
      %s158 = sphi 0, %s142
    $region4: #{tpu_custom_call.1} parent=1 // loop_header_branch
      %21 = sbr.rel (%p19) target = $region8
    $region5: #{tpu_custom_call.1} parent=1 // loop_body
      %s23 = ssub.s32 %s18, 1
      %s24 = ssub.s32 %s18, 2
      %s25 = sadd.s32 %s18, 1
      %s26 = ssub.s32 %s18, %s25
      %p27 = scmp.eq.s32.totalorder %s26, 0
      %s29 = sadd.s32 %s28, 1
      %s30 = scalar_select %p27, %s28, %s29
      %p33 = pneg %p27
      %p34 = scmp.eq.s32.totalorder %s18, 1
      %p35 = por %p33, %p34
      %p36 = scmp.ne.s32.totalorder %s28, %s31
      %p37 = scmp.eq.s32.totalorder %s18, 0
      %p38 = por %p36, %p37
      %p39 = scmp.ne.s32.totalorder %s28, %s31
      %p40 = scmp.eq.s32.totalorder %s23, 1
      %p41 = por %p39, %p40
      %p42 = scmp.ne.s32.totalorder %s31, %s32
      %p43 = scmp.eq.s32.totalorder %s23, 0
      %p44 = por %p42, %p43
      %p45 = scmp.ne.s32.totalorder %s31, %s32
      %p46 = scmp.eq.s32.totalorder %s24, 1
      %p47 = por %p45, %p46
      %p49 = scmp.ne.s32.totalorder %s32, %s48
      %p50 = scmp.eq.s32.totalorder %s24, 0
      %p51 = por %p49, %p50
      %s53 = sadd.s32 %s52, 1
      %p56 = scmp.eq.s32.totalorder %s18, 1
      %p57 = scmp.ne.s32.totalorder %s52, %s54
      %p58 = scmp.eq.s32.totalorder %s18, 0
      %p59 = por %p57, %p58
      %p60 = scmp.ne.s32.totalorder %s52, %s54
      %p61 = scmp.eq.s32.totalorder %s23, 1
      %p62 = por %p60, %p61
      %p63 = scmp.ne.s32.totalorder %s54, %s55
      %p64 = scmp.eq.s32.totalorder %s23, 0
      %p65 = por %p63, %p64
      %p66 = scmp.ne.s32.totalorder %s54, %s55
      %p67 = scmp.eq.s32.totalorder %s24, 1
      %p68 = por %p66, %p67
      %p70 = scmp.ne.s32.totalorder %s55, %s69
      %p71 = scmp.eq.s32.totalorder %s24, 0
      %p72 = por %p70, %p71
      %s74 = sadd.s32 %s73, 1
      %p77 = scmp.eq.s32.totalorder %s18, 1
      %p78 = scmp.ne.s32.totalorder %s73, %s75
      %p79 = scmp.eq.s32.totalorder %s18, 0
      %p80 = por %p78, %p79
      %p81 = scmp.ne.s32.totalorder %s73, %s75
      %p82 = scmp.eq.s32.totalorder %s23, 1
      %p83 = por %p81, %p82
      %p84 = scmp.ne.s32.totalorder %s75, %s76
      %p85 = scmp.eq.s32.totalorder %s23, 0
      %p86 = por %p84, %p85
      %p87 = scmp.ne.s32.totalorder %s75, %s76
      %p88 = scmp.eq.s32.totalorder %s24, 1
      %p89 = por %p87, %p88
      %p91 = scmp.ne.s32.totalorder %s76, %s90
      %p92 = scmp.eq.s32.totalorder %s24, 0
      %p93 = por %p91, %p92
      %s95 = sadd.s32 %s94, 1
      %p98 = scmp.eq.s32.totalorder %s18, 1
      %p99 = scmp.ne.s32.totalorder %s94, %s96
      %p100 = scmp.eq.s32.totalorder %s18, 0
      %p101 = por %p99, %p100
      %p102 = scmp.ne.s32.totalorder %s94, %s96
      %p103 = scmp.eq.s32.totalorder %s23, 1
      %p104 = por %p102, %p103
      %p105 = scmp.ne.s32.totalorder %s96, %s97
      %p106 = scmp.eq.s32.totalorder %s23, 0
      %p107 = por %p105, %p106
      %p108 = scmp.ne.s32.totalorder %s96, %s97
      %p109 = scmp.eq.s32.totalorder %s24, 1
      %p110 = por %p108, %p109
      %p112 = scmp.ne.s32.totalorder %s97, %s111
      %p113 = scmp.eq.s32.totalorder %s24, 0
      %p114 = por %p112, %p113
      %s116 = sadd.s32 %s115, 1
      %p119 = scmp.eq.s32.totalorder %s18, 1
      %p120 = scmp.ne.s32.totalorder %s115, %s117
      %p121 = scmp.eq.s32.totalorder %s18, 0
      %p122 = por %p120, %p121
      %p123 = scmp.ne.s32.totalorder %s115, %s117
      %p124 = scmp.eq.s32.totalorder %s23, 1
      %p125 = por %p123, %p124
      %p126 = scmp.ne.s32.totalorder %s117, %s118
      %p127 = scmp.eq.s32.totalorder %s23, 0
      %p128 = por %p126, %p127
      %p129 = scmp.ne.s32.totalorder %s117, %s118
      %p130 = scmp.eq.s32.totalorder %s24, 1
      %p131 = por %p129, %p130
      %p133 = scmp.ne.s32.totalorder %s118, %s132
      %p134 = scmp.eq.s32.totalorder %s24, 0
      %p135 = por %p133, %p134
      %s136 = ssub.s32 %s18, %s25
      %p137 = scmp.eq.s32.totalorder %s136, 0
      %s139 = sadd.s32 %s138, 1
      %s140 = scalar_select %p137, %s138, %s139
      %p143 = pneg %p137
      %p144 = scmp.eq.s32.totalorder %s18, 1
      %p145 = por %p143, %p144
      %p146 = scmp.ne.s32.totalorder %s138, %s141
      %p147 = scmp.eq.s32.totalorder %s18, 0
      %p148 = por %p146, %p147
      %p149 = scmp.ne.s32.totalorder %s138, %s141
      %p150 = scmp.eq.s32.totalorder %s23, 1
      %p151 = por %p149, %p150
      %p152 = scmp.ne.s32.totalorder %s141, %s142
      %p153 = scmp.eq.s32.totalorder %s23, 0
      %p154 = por %p152, %p153
      %p155 = scmp.ne.s32.totalorder %s141, %s142
      %p156 = scmp.eq.s32.totalorder %s24, 1
      %p157 = por %p155, %p156
      %p159 = scmp.ne.s32.totalorder %s142, %s158
      %p160 = scmp.eq.s32.totalorder %s24, 0
      %p161 = por %p159, %p160
      %p162 = scmp.le.s32.totalorder 1, %s18
      %p163 = scmp.lt.s32.totalorder %s18, 3
      %p164 = pnand %p162, %p163
      %p165 = pneg %p164
      // Predicated region
      $region9: #{tpu_custom_call.1} parent=5 // pred_check
        _
      $region10: #{tpu_custom_call.1} parent=5 // pred_check_branch
        %167 = sbr.rel (%p164) target = $region12
      $region11: #{tpu_custom_call.1} parent=5 // pred_region
        %s168 = ssub.s32 %s18, 1
        // Predicated region
        $region13: #{tpu_custom_call.1} parent=11 // pred_check
          %p169 = pneg %p65
        $region14: #{tpu_custom_call.1} parent=11 // pred_check_branch
          %171 = sbr.rel (%p169) target = $region16
        $region15: #{tpu_custom_call.1} parent=11 // pred_region
          %s173 = ssub.s32 4096, 4096
          %174 = vsyncadd [#allocation6], %s173
          %s175 = sshll.u32 [#allocation5], 4
          %s176 = int_to_ptr.vmem [resolvable:$true] %s175
          %181 = dma.hbm_to_vmem [thread:$0]  %s1, 4096, %s176, [#allocation6], 256, 256, 16
        $region16: #{tpu_custom_call.1} parent=11 // pred_fallthru
          _
        // Predicated region
        $region17: #{tpu_custom_call.1} parent=11 // pred_check
          %p182 = pneg %p86
        $region18: #{tpu_custom_call.1} parent=11 // pred_check_branch
          %184 = sbr.rel (%p182) target = $region20
        $region19: #{tpu_custom_call.1} parent=11 // pred_region
          _
        $region20: #{tpu_custom_call.1} parent=11 // pred_fallthru
          _
        // Predicated region
        $region21: #{tpu_custom_call.1} parent=11 // pred_check
          %p185 = pneg %p107
        $region22: #{tpu_custom_call.1} parent=11 // pred_check_branch
          %187 = sbr.rel (%p185) target = $region24
        $region23: #{tpu_custom_call.1} parent=11 // pred_region
          %s189 = ssub.s32 4096, 4096
          %190 = vsyncadd [#allocation6], %s189
          %s191 = sshll.u32 [#allocation7], 4
          %s192 = int_to_ptr.vmem [resolvable:$true] %s191
          %197 = dma.hbm_to_vmem [thread:$0]  %s3, 4096, %s192, [#allocation6], 128, 128, 8
        $region24: #{tpu_custom_call.1} parent=11 // pred_fallthru
          _
        // Predicated region
        $region25: #{tpu_custom_call.1} parent=11 // pred_check
          %p198 = pneg %p128
        $region26: #{tpu_custom_call.1} parent=11 // pred_check_branch
          %200 = sbr.rel (%p198) target = $region28
        $region27: #{tpu_custom_call.1} parent=11 // pred_region
          _
        $region28: #{tpu_custom_call.1} parent=11 // pred_fallthru
          _
      $region12: #{tpu_custom_call.1} parent=5 // pred_fallthru
        _
      %p201 = scmp.lt.s32.totalorder %s18, 2
      // Predicated region
      $region29: #{tpu_custom_call.1} parent=5 // pred_check
        %p202 = pneg %p201
      $region30: #{tpu_custom_call.1} parent=5 // pred_check_branch
        %204 = sbr.rel (%p202) target = $region32
      $region31: #{tpu_custom_call.1} parent=5 // pred_region
        // Predicated region
        $region33: #{tpu_custom_call.1} parent=31 // pred_check
          %p205 = pneg %p38
        $region34: #{tpu_custom_call.1} parent=31 // pred_check_branch
          %207 = sbr.rel (%p205) target = $region36
        $region35: #{tpu_custom_call.1} parent=31 // pred_region
          %s208 = sand.u32 %s28, 1
          %s209 = scalar_lea.sflag [#allocation3], %s208
          %s210 = sand.u32 %s28, 1
          %s211 = smul.addr %s210, 128
          %s212 = scalar_lea.vmem [#allocation2], %s211
          %s213 = smul.u32 16, %s18
          %s215 = ssub.s32 2048, 2048
          %216 = vsyncadd %s209, %s215
          %s217 = smul.addr %s213, 128
          %s218 = scalar_lea.hbm %s0, %s217
          %s219 = sshll.u32 %s212, 4
          %s220 = int_to_ptr.vmem [resolvable:$true] %s219
          %225 = dma.hbm_to_vmem [thread:$0]  %s218, 2048, %s220, %s209, 128, 128, 8
        $region36: #{tpu_custom_call.1} parent=31 // pred_fallthru
          _
      $region32: #{tpu_custom_call.1} parent=5 // pred_fallthru
        _
      %p226 = scmp.le.s32.totalorder 1, %s18
      %p227 = scmp.lt.s32.totalorder %s18, 3
      %p228 = pnand %p226, %p227
      %p229 = pneg %p228
      // Predicated region
      $region37: #{tpu_custom_call.1} parent=5 // pred_check
        _
      $region38: #{tpu_custom_call.1} parent=5 // pred_check_branch
        %231 = sbr.rel (%p228) target = $region40
      $region39: #{tpu_custom_call.1} parent=5 // pred_region
        %s232 = ssub.s32 %s18, 1
        %s233 = sand.u32 %s31, 1
        %s234 = scalar_lea.sflag [#allocation3], %s233
        %s235 = sand.u32 %s31, 1
        %s236 = smul.addr %s235, 128
        %s237 = scalar_lea.vmem [#allocation2], %s236
        // Predicated region
        $region41: #{tpu_custom_call.1} parent=39 // pred_check
          %p238 = pneg %p44
        $region42: #{tpu_custom_call.1} parent=39 // pred_check_branch
          %240 = sbr.rel (%p238) target = $region44
        $region43: #{tpu_custom_call.1} parent=39 // pred_region
          %241 = dma.done %s234, 2048
        $region44: #{tpu_custom_call.1} parent=39 // pred_fallthru
          _
        // Predicated region
        $region45: #{tpu_custom_call.1} parent=39 // pred_check
          %p242 = pneg %p65
        $region46: #{tpu_custom_call.1} parent=39 // pred_check_branch
          %244 = sbr.rel (%p242) target = $region48
        $region47: #{tpu_custom_call.1} parent=39 // pred_region
          %245 = dma.done [#allocation6], 4096
        $region48: #{tpu_custom_call.1} parent=39 // pred_fallthru
          _
        // Predicated region
        $region49: #{tpu_custom_call.1} parent=39 // pred_check
          %p246 = pneg %p107
        $region50: #{tpu_custom_call.1} parent=39 // pred_check_branch
          %248 = sbr.rel (%p246) target = $region52
        $region51: #{tpu_custom_call.1} parent=39 // pred_region
          %249 = dma.done [#allocation6], 4096
        $region52: #{tpu_custom_call.1} parent=39 // pred_fallthru
          _
        %s250 = sand.u32 %s31, 1
        %s251 = scalar_lea.sflag [#allocation3], %s250
        %s252 = sand.u32 %s31, 1
        %s253 = smul.addr %s252, 128
        %s254 = scalar_lea.vmem [#allocation2], %s253
        %p255 = pneg %p44
        %p256 = pneg %p41
        %p257 = pneg %p65
        %p258 = pneg %p62
        %p259 = pneg %p86
        %p260 = pneg %p83
        %p261 = pneg %p107
        %p262 = pneg %p104
        %p263 = pneg %p128
        %p264 = pneg %p125
        %p265 = pneg %p154
        %p266 = pneg %p151
        %s267 = sand.u32 %s141, 1
        %s268 = scalar_lea.sflag [#allocation4], %s267
        %s269 = sand.u32 %s141, 1
        %s270 = smul.addr %s269, 128
        %s271 = scalar_lea.vmem [#allocation8], %s270
        %s272 = smul.u32 16, %s23
        %s273 = smul.u32 16, %s23
        %v274 = vld [vmem:[%s237] sm:$0xff]
        %v275 = vld [vmem:[%s237 + $0x8] sm:$0xff]
        %v276 = vld [vmem:[%s237 + $0x10] sm:$0xff]
        %v277 = vld [vmem:[%s237 + $0x18] sm:$0xff]
        %v278 = vld [vmem:[%s237 + $0x20] sm:$0xff]
        %v279 = vld [vmem:[%s237 + $0x28] sm:$0xff]
        %v280 = vld [vmem:[%s237 + $0x30] sm:$0xff]
        %v281 = vld [vmem:[%s237 + $0x38] sm:$0xff]
        %v282 = vld [vmem:[%s237 + $0x40] sm:$0xff]
        %v283 = vld [vmem:[%s237 + $0x48] sm:$0xff]
        %v284 = vld [vmem:[%s237 + $0x50] sm:$0xff]
        %v285 = vld [vmem:[%s237 + $0x58] sm:$0xff]
        %v286 = vld [vmem:[%s237 + $0x60] sm:$0xff]
        %v287 = vld [vmem:[%s237 + $0x68] sm:$0xff]
        %v288 = vld [vmem:[%s237 + $0x70] sm:$0xff]
        %v289 = vld [vmem:[%s237 + $0x78] sm:$0xff]
        %v290 = vld [vmem:[#allocation5] sm:$0xff]
        %v291 = vld [vmem:[#allocation5 + $0x8] sm:$0xff]
        %v292 = vld [vmem:[#allocation5 + $0x10] sm:$0xff]
        %v293 = vld [vmem:[#allocation5 + $0x18] sm:$0xff]
        %v294 = vld [vmem:[#allocation5 + $0x20] sm:$0xff]
        %v295 = vld [vmem:[#allocation5 + $0x28] sm:$0xff]
        %v296 = vld [vmem:[#allocation5 + $0x30] sm:$0xff]
        %v297 = vld [vmem:[#allocation5 + $0x38] sm:$0xff]
        %v298 = vld [vmem:[#allocation5 + $0x40] sm:$0xff]
        %v299 = vld [vmem:[#allocation5 + $0x48] sm:$0xff]
        %v300 = vld [vmem:[#allocation5 + $0x50] sm:$0xff]
        %v301 = vld [vmem:[#allocation5 + $0x58] sm:$0xff]
        %v302 = vld [vmem:[#allocation5 + $0x60] sm:$0xff]
        %v303 = vld [vmem:[#allocation5 + $0x68] sm:$0xff]
        %v304 = vld [vmem:[#allocation5 + $0x70] sm:$0xff]
        %v305 = vld [vmem:[#allocation5 + $0x78] sm:$0xff]
        %v306 = vld [vmem:[#allocation5 + $0x80] sm:$0xff]
        %v307 = vld [vmem:[#allocation5 + $0x88] sm:$0xff]
        %v308 = vld [vmem:[#allocation5 + $0x90] sm:$0xff]
        %v309 = vld [vmem:[#allocation5 + $0x98] sm:$0xff]
        %v310 = vld [vmem:[#allocation5 + $0xa0] sm:$0xff]
        %v311 = vld [vmem:[#allocation5 + $0xa8] sm:$0xff]
        %v312 = vld [vmem:[#allocation5 + $0xb0] sm:$0xff]
        %v313 = vld [vmem:[#allocation5 + $0xb8] sm:$0xff]
        %v314 = vld [vmem:[#allocation5 + $0xc0] sm:$0xff]
        %v315 = vld [vmem:[#allocation5 + $0xc8] sm:$0xff]
        %v316 = vld [vmem:[#allocation5 + $0xd0] sm:$0xff]
        %v317 = vld [vmem:[#allocation5 + $0xd8] sm:$0xff]
        %v318 = vld [vmem:[#allocation5 + $0xe0] sm:$0xff]
        %v319 = vld [vmem:[#allocation5 + $0xe8] sm:$0xff]
        %v320 = vld [vmem:[#allocation5 + $0xf0] sm:$0xff]
        %v321 = vld [vmem:[#allocation5 + $0xf8] sm:$0xff]
        %v322 = vld [vmem:[%s2] sm:$0x3]
        %v324 = vlaneseq
        %v325 = vshrl.u32 %v324, 7
        %v326 = vsub.s32 0, %v325
        %v327 = vrot.slane %v322, %v326
        %v328 = vlaneseq
        %v329 = vshrl.u32 %v328, 7
        %v330 = vsub.s32 1, %v329
        %v331 = vrot.slane %v322, %v330
        %334 = vmatprep.subr.mxu0 %v321
        %335 = vmatpush1.msra.mxu0 %v320
        %336 = vmatprep.subr.mxu0 %v319
        %337 = vmatpush1.msra.mxu0 %v318
        %338 = vmatprep.subr.mxu0 %v317
        %339 = vmatpush1.msra.mxu0 %v316
        %340 = vmatprep.subr.mxu0 %v315
        %341 = vmatpush1.msra.mxu0 %v314
        %342 = vmatprep.subr.mxu0 %v313
        %343 = vmatpush1.msra.mxu0 %v312
        %344 = vmatprep.subr.mxu0 %v311
        %345 = vmatpush1.msra.mxu0 %v310
        %346 = vmatprep.subr.mxu0 %v309
        %347 = vmatpush1.msra.mxu0 %v308
        %348 = vmatprep.subr.mxu0 %v307
        %349 = vmatpush1.msra.mxu0 %v306
        %350 = vmatprep.subr.mxu0 %v305
        %351 = vmatpush1.msra.mxu0 %v304
        %352 = vmatprep.subr.mxu0 %v303
        %353 = vmatpush1.msra.mxu0 %v302
        %354 = vmatprep.subr.mxu0 %v301
        %355 = vmatpush1.msra.mxu0 %v300
        %356 = vmatprep.subr.mxu0 %v299
        %357 = vmatpush1.msra.mxu0 %v298
        %358 = vmatprep.subr.mxu0 %v297
        %359 = vmatpush1.msra.mxu0 %v296
        %360 = vmatprep.subr.mxu0 %v295
        %361 = vmatpush1.msra.mxu0 %v294
        %362 = vmatprep.subr.mxu0 %v293
        %363 = vmatpush1.msra.mxu0 %v292
        %364 = vmatprep.subr.mxu0 %v291
        %365 = vmatpush1.msra.mxu0 %v290
        %366 = vmatprep.subr.mxu0 0.0
        %367 = vmatpush2.msra.mxu0 0.0
        %368 = vmatprep.subr.mxu0 0.0
        %369 = vmatpush2.msra.mxu0 0.0
        %370 = vmatprep.subr.mxu0 0.0
        %371 = vmatpush2.msra.mxu0 0.0
        %372 = vmatprep.subr.mxu0 0.0
        %373 = vmatpush2.msra.mxu0 0.0
        %374 = vmatprep.subr.mxu0 0.0
        %375 = vmatpush2.msra.mxu0 0.0
        %376 = vmatprep.subr.mxu0 0.0
        %377 = vmatpush2.msra.mxu0 0.0
        %378 = vmatprep.subr.mxu0 0.0
        %379 = vmatpush2.msra.mxu0 0.0
        %380 = vmatprep.subr.mxu0 0.0
        %381 = vmatpush2.msra.mxu0 0.0
        %382 = vmatprep.subr.mxu0 0.0
        %383 = vmatpush2.msra.mxu0 0.0
        %384 = vmatprep.subr.mxu0 0.0
        %385 = vmatpush2.msra.mxu0 0.0
        %386 = vmatprep.subr.mxu0 0.0
        %387 = vmatpush2.msra.mxu0 0.0
        %388 = vmatprep.subr.mxu0 0.0
        %389 = vmatpush2.msra.mxu0 0.0
        %390 = vmatprep.subr.mxu0 0.0
        %391 = vmatpush2.msra.mxu0 0.0
        %392 = vmatprep.subr.mxu0 0.0
        %393 = vmatpush2.msra.mxu0 0.0
        %394 = vmatprep.subr.mxu0 0.0
        %395 = vmatpush2.msra.mxu0 0.0
        %396 = vmatprep.subr.mxu0 0.0
        %397 = vmatpush2.msra.mxu0 0.0
        %398 = vmatprep.mubr.f32.mxu0 0.0
        %399 = vmatmul.mubr.f32.gmra.mxu0 %v274
        %v400 = vpop.f32.mrf.mxu0
        %v401 = vadd.f32 %v327, %v400
        %v402 = vpop.f32.mrf.mxu0
        %v403 = vadd.f32 %v331, %v402
        %404 = vmatprep.mubr.f32.mxu0 0.0
        %405 = vmatmul.mubr.f32.gmra.mxu0 %v275
        %v406 = vpop.f32.mrf.mxu0
        %v407 = vadd.f32 %v327, %v406
        %v408 = vpop.f32.mrf.mxu0
        %v409 = vadd.f32 %v331, %v408
        %410 = vmatprep.mubr.f32.mxu0 0.0
        %411 = vmatmul.mubr.f32.gmra.mxu0 %v276
        %v412 = vpop.f32.mrf.mxu0
        %v413 = vadd.f32 %v327, %v412
        %v414 = vpop.f32.mrf.mxu0
        %v415 = vadd.f32 %v331, %v414
        %416 = vmatprep.mubr.f32.mxu0 0.0
        %417 = vmatmul.mubr.f32.gmra.mxu0 %v277
        %v418 = vpop.f32.mrf.mxu0
        %v419 = vadd.f32 %v327, %v418
        %v420 = vpop.f32.mrf.mxu0
        %v421 = vadd.f32 %v331, %v420
        %422 = vmatprep.mubr.f32.mxu0 0.0
        %423 = vmatmul.mubr.f32.gmra.mxu0 %v278
        %v424 = vpop.f32.mrf.mxu0
        %v425 = vadd.f32 %v327, %v424
        %v426 = vpop.f32.mrf.mxu0
        %v427 = vadd.f32 %v331, %v426
        %428 = vmatprep.mubr.f32.mxu0 0.0
        %429 = vmatmul.mubr.f32.gmra.mxu0 %v279
        %v430 = vpop.f32.mrf.mxu0
        %v431 = vadd.f32 %v327, %v430
        %v432 = vpop.f32.mrf.mxu0
        %v433 = vadd.f32 %v331, %v432
        %434 = vmatprep.mubr.f32.mxu0 0.0
        %435 = vmatmul.mubr.f32.gmra.mxu0 %v280
        %v436 = vpop.f32.mrf.mxu0
        %v437 = vadd.f32 %v327, %v436
        %v438 = vpop.f32.mrf.mxu0
        %v439 = vadd.f32 %v331, %v438
        %440 = vmatprep.mubr.f32.mxu0 0.0
        %441 = vmatmul.mubr.f32.gmra.mxu0 %v281
        %v442 = vpop.f32.mrf.mxu0
        %v443 = vadd.f32 %v327, %v442
        %v444 = vpop.f32.mrf.mxu0
        %v445 = vadd.f32 %v331, %v444
        %446 = vmatprep.mubr.f32.mxu0 0.0
        %447 = vmatmul.mubr.f32.gmra.mxu0 %v282
        %v448 = vpop.f32.mrf.mxu0
        %v449 = vadd.f32 %v327, %v448
        %v450 = vpop.f32.mrf.mxu0
        %v451 = vadd.f32 %v331, %v450
        %452 = vmatprep.mubr.f32.mxu0 0.0
        %453 = vmatmul.mubr.f32.gmra.mxu0 %v283
        %v454 = vpop.f32.mrf.mxu0
        %v455 = vadd.f32 %v327, %v454
        %v456 = vpop.f32.mrf.mxu0
        %v457 = vadd.f32 %v331, %v456
        %458 = vmatprep.mubr.f32.mxu0 0.0
        %459 = vmatmul.mubr.f32.gmra.mxu0 %v284
        %v460 = vpop.f32.mrf.mxu0
        %v461 = vadd.f32 %v327, %v460
        %v462 = vpop.f32.mrf.mxu0
        %v463 = vadd.f32 %v331, %v462
        %464 = vmatprep.mubr.f32.mxu0 0.0
        %465 = vmatmul.mubr.f32.gmra.mxu0 %v285
        %v466 = vpop.f32.mrf.mxu0
        %v467 = vadd.f32 %v327, %v466
        %v468 = vpop.f32.mrf.mxu0
        %v469 = vadd.f32 %v331, %v468
        %470 = vmatprep.mubr.f32.mxu0 0.0
        %471 = vmatmul.mubr.f32.gmra.mxu0 %v286
        %v472 = vpop.f32.mrf.mxu0
        %v473 = vadd.f32 %v327, %v472
        %v474 = vpop.f32.mrf.mxu0
        %v475 = vadd.f32 %v331, %v474
        %476 = vmatprep.mubr.f32.mxu0 0.0
        %477 = vmatmul.mubr.f32.gmra.mxu0 %v287
        %v478 = vpop.f32.mrf.mxu0
        %v479 = vadd.f32 %v327, %v478
        %v480 = vpop.f32.mrf.mxu0
        %v481 = vadd.f32 %v331, %v480
        %482 = vmatprep.mubr.f32.mxu0 0.0
        %483 = vmatmul.mubr.f32.gmra.mxu0 %v288
        %v484 = vpop.f32.mrf.mxu0
        %v485 = vadd.f32 %v327, %v484
        %v486 = vpop.f32.mrf.mxu0
        %v487 = vadd.f32 %v331, %v486
        %488 = vmatprep.mubr.f32.mxu0 0.0
        %489 = vmatmul.mubr.f32.gmra.mxu0 %v289
        %v490 = vpop.f32.mrf.mxu0
        %v491 = vadd.f32 %v327, %v490
        %v492 = vpop.f32.mrf.mxu0
        %v493 = vadd.f32 %v331, %v492
        %494 = vdwg.mxu0
        %v495 = vmul.f32 %v401, 0.5
        %v496 = vmul.f32 %v403, 0.5
        %v497 = vmul.f32 %v407, 0.5
        %v498 = vmul.f32 %v409, 0.5
        %v499 = vmul.f32 %v413, 0.5
        %v500 = vmul.f32 %v415, 0.5
        %v501 = vmul.f32 %v419, 0.5
        %v502 = vmul.f32 %v421, 0.5
        %v503 = vmul.f32 %v425, 0.5
        %v504 = vmul.f32 %v427, 0.5
        %v505 = vmul.f32 %v431, 0.5
        %v506 = vmul.f32 %v433, 0.5
        %v507 = vmul.f32 %v437, 0.5
        %v508 = vmul.f32 %v439, 0.5
        %v509 = vmul.f32 %v443, 0.5
        %v510 = vmul.f32 %v445, 0.5
        %v511 = vmul.f32 %v449, 0.5
        %v512 = vmul.f32 %v451, 0.5
        %v513 = vmul.f32 %v455, 0.5
        %v514 = vmul.f32 %v457, 0.5
        %v515 = vmul.f32 %v461, 0.5
        %v516 = vmul.f32 %v463, 0.5
        %v517 = vmul.f32 %v467, 0.5
        %v518 = vmul.f32 %v469, 0.5
        %v519 = vmul.f32 %v473, 0.5
        %v520 = vmul.f32 %v475, 0.5
        %v521 = vmul.f32 %v479, 0.5
        %v522 = vmul.f32 %v481, 0.5
        %v523 = vmul.f32 %v485, 0.5
        %v524 = vmul.f32 %v487, 0.5
        %v525 = vmul.f32 %v491, 0.5
        %v526 = vmul.f32 %v493, 0.5
        %v527 = vmul.f32 %v401, 0.70710677
        %v528 = vmul.f32 %v403, 0.70710677
        %v529 = vmul.f32 %v407, 0.70710677
        %v530 = vmul.f32 %v409, 0.70710677
        %v531 = vmul.f32 %v413, 0.70710677
        %v532 = vmul.f32 %v415, 0.70710677
        %v533 = vmul.f32 %v419, 0.70710677
        %v534 = vmul.f32 %v421, 0.70710677
        %v535 = vmul.f32 %v425, 0.70710677
        %v536 = vmul.f32 %v427, 0.70710677
        %v537 = vmul.f32 %v431, 0.70710677
        %v538 = vmul.f32 %v433, 0.70710677
        %v539 = vmul.f32 %v437, 0.70710677
        %v540 = vmul.f32 %v439, 0.70710677
        %v541 = vmul.f32 %v443, 0.70710677
        %v542 = vmul.f32 %v445, 0.70710677
        %v543 = vmul.f32 %v449, 0.70710677
        %v544 = vmul.f32 %v451, 0.70710677
        %v545 = vmul.f32 %v455, 0.70710677
        %v546 = vmul.f32 %v457, 0.70710677
        %v547 = vmul.f32 %v461, 0.70710677
        %v548 = vmul.f32 %v463, 0.70710677
        %v549 = vmul.f32 %v467, 0.70710677
        %v550 = vmul.f32 %v469, 0.70710677
        %v551 = vmul.f32 %v473, 0.70710677
        %v552 = vmul.f32 %v475, 0.70710677
        %v553 = vmul.f32 %v479, 0.70710677
        %v554 = vmul.f32 %v481, 0.70710677
        %v555 = vmul.f32 %v485, 0.70710677
        %v556 = vmul.f32 %v487, 0.70710677
        %v557 = vmul.f32 %v491, 0.70710677
        %v558 = vmul.f32 %v493, 0.70710677
        %v559 = verf.f32.pop %v527
        %v560 = verf.f32.pop %v528
        %v561 = verf.f32.pop %v529
        %v562 = verf.f32.pop %v530
        %v563 = verf.f32.pop %v531
        %v564 = verf.f32.pop %v532
        %v565 = verf.f32.pop %v533
        %v566 = verf.f32.pop %v534
        %v567 = verf.f32.pop %v535
        %v568 = verf.f32.pop %v536
        %v569 = verf.f32.pop %v537
        %v570 = verf.f32.pop %v538
        %v571 = verf.f32.pop %v539
        %v572 = verf.f32.pop %v540
        %v573 = verf.f32.pop %v541
        %v574 = verf.f32.pop %v542
        %v575 = verf.f32.pop %v543
        %v576 = verf.f32.pop %v544
        %v577 = verf.f32.pop %v545
        %v578 = verf.f32.pop %v546
        %v579 = verf.f32.pop %v547
        %v580 = verf.f32.pop %v548
        %v581 = verf.f32.pop %v549
        %v582 = verf.f32.pop %v550
        %v583 = verf.f32.pop %v551
        %v584 = verf.f32.pop %v552
        %v585 = verf.f32.pop %v553
        %v586 = verf.f32.pop %v554
        %v587 = verf.f32.pop %v555
        %v588 = verf.f32.pop %v556
        %v589 = verf.f32.pop %v557
        %v590 = verf.f32.pop %v558
        %v591 = vadd.f32 %v559, 1.0
        %v592 = vadd.f32 %v560, 1.0
        %v593 = vadd.f32 %v561, 1.0
        %v594 = vadd.f32 %v562, 1.0
        %v595 = vadd.f32 %v563, 1.0
        %v596 = vadd.f32 %v564, 1.0
        %v597 = vadd.f32 %v565, 1.0
        %v598 = vadd.f32 %v566, 1.0
        %v599 = vadd.f32 %v567, 1.0
        %v600 = vadd.f32 %v568, 1.0
        %v601 = vadd.f32 %v569, 1.0
        %v602 = vadd.f32 %v570, 1.0
        %v603 = vadd.f32 %v571, 1.0
        %v604 = vadd.f32 %v572, 1.0
        %v605 = vadd.f32 %v573, 1.0
        %v606 = vadd.f32 %v574, 1.0
        %v607 = vadd.f32 %v575, 1.0
        %v608 = vadd.f32 %v576, 1.0
        %v609 = vadd.f32 %v577, 1.0
        %v610 = vadd.f32 %v578, 1.0
        %v611 = vadd.f32 %v579, 1.0
        %v612 = vadd.f32 %v580, 1.0
        %v613 = vadd.f32 %v581, 1.0
        %v614 = vadd.f32 %v582, 1.0
        %v615 = vadd.f32 %v583, 1.0
        %v616 = vadd.f32 %v584, 1.0
        %v617 = vadd.f32 %v585, 1.0
        %v618 = vadd.f32 %v586, 1.0
        %v619 = vadd.f32 %v587, 1.0
        %v620 = vadd.f32 %v588, 1.0
        %v621 = vadd.f32 %v589, 1.0
        %v622 = vadd.f32 %v590, 1.0
        %v623 = vmul.f32 %v495, %v591
        %v624 = vmul.f32 %v496, %v592
        %v625 = vmul.f32 %v497, %v593
        %v626 = vmul.f32 %v498, %v594
        %v627 = vmul.f32 %v499, %v595
        %v628 = vmul.f32 %v500, %v596
        %v629 = vmul.f32 %v501, %v597
        %v630 = vmul.f32 %v502, %v598
        %v631 = vmul.f32 %v503, %v599
        %v632 = vmul.f32 %v504, %v600
        %v633 = vmul.f32 %v505, %v601
        %v634 = vmul.f32 %v506, %v602
        %v635 = vmul.f32 %v507, %v603
        %v636 = vmul.f32 %v508, %v604
        %v637 = vmul.f32 %v509, %v605
        %v638 = vmul.f32 %v510, %v606
        %v639 = vmul.f32 %v511, %v607
        %v640 = vmul.f32 %v512, %v608
        %v641 = vmul.f32 %v513, %v609
        %v642 = vmul.f32 %v514, %v610
        %v643 = vmul.f32 %v515, %v611
        %v644 = vmul.f32 %v516, %v612
        %v645 = vmul.f32 %v517, %v613
        %v646 = vmul.f32 %v518, %v614
        %v647 = vmul.f32 %v519, %v615
        %v648 = vmul.f32 %v520, %v616
        %v649 = vmul.f32 %v521, %v617
        %v650 = vmul.f32 %v522, %v618
        %v651 = vmul.f32 %v523, %v619
        %v652 = vmul.f32 %v524, %v620
        %v653 = vmul.f32 %v525, %v621
        %v654 = vmul.f32 %v526, %v622
        %v655 = vld [vmem:[#allocation7] sm:$0xff]
        %v656 = vld [vmem:[#allocation7 + $0x8] sm:$0xff]
        %v657 = vld [vmem:[#allocation7 + $0x10] sm:$0xff]
        %v658 = vld [vmem:[#allocation7 + $0x18] sm:$0xff]
        %v659 = vld [vmem:[#allocation7 + $0x20] sm:$0xff]
        %v660 = vld [vmem:[#allocation7 + $0x28] sm:$0xff]
        %v661 = vld [vmem:[#allocation7 + $0x30] sm:$0xff]
        %v662 = vld [vmem:[#allocation7 + $0x38] sm:$0xff]
        %v663 = vld [vmem:[#allocation7 + $0x40] sm:$0xff]
        %v664 = vld [vmem:[#allocation7 + $0x48] sm:$0xff]
        %v665 = vld [vmem:[#allocation7 + $0x50] sm:$0xff]
        %v666 = vld [vmem:[#allocation7 + $0x58] sm:$0xff]
        %v667 = vld [vmem:[#allocation7 + $0x60] sm:$0xff]
        %v668 = vld [vmem:[#allocation7 + $0x68] sm:$0xff]
        %v669 = vld [vmem:[#allocation7 + $0x70] sm:$0xff]
        %v670 = vld [vmem:[#allocation7 + $0x78] sm:$0xff]
        %v671 = vld [vmem:[#allocation7 + $0x80] sm:$0xff]
        %v672 = vld [vmem:[#allocation7 + $0x88] sm:$0xff]
        %v673 = vld [vmem:[#allocation7 + $0x90] sm:$0xff]
        %v674 = vld [vmem:[#allocation7 + $0x98] sm:$0xff]
        %v675 = vld [vmem:[#allocation7 + $0xa0] sm:$0xff]
        %v676 = vld [vmem:[#allocation7 + $0xa8] sm:$0xff]
        %v677 = vld [vmem:[#allocation7 + $0xb0] sm:$0xff]
        %v678 = vld [vmem:[#allocation7 + $0xb8] sm:$0xff]
        %v679 = vld [vmem:[#allocation7 + $0xc0] sm:$0xff]
        %v680 = vld [vmem:[#allocation7 + $0xc8] sm:$0xff]
        %v681 = vld [vmem:[#allocation7 + $0xd0] sm:$0xff]
        %v682 = vld [vmem:[#allocation7 + $0xd8] sm:$0xff]
        %v683 = vld [vmem:[#allocation7 + $0xe0] sm:$0xff]
        %v684 = vld [vmem:[#allocation7 + $0xe8] sm:$0xff]
        %v685 = vld [vmem:[#allocation7 + $0xf0] sm:$0xff]
        %v686 = vld [vmem:[#allocation7 + $0xf8] sm:$0xff]
        %v687 = vld [vmem:[%s4] sm:$0x1]
        %v689 = vlaneseq
        %v690 = vshrl.u32 %v689, 7
        %v691 = vsub.s32 0, %v690
        %v692 = vrot.slane %v687, %v691
        %694 = vmatprep.subr.mxu0 0.0
        %695 = vmatpush1.msra.mxu0 %v670
        %696 = vmatprep.subr.mxu0 0.0
        %697 = vmatpush1.msra.mxu0 %v669
        %698 = vmatprep.subr.mxu0 0.0
        %699 = vmatpush1.msra.mxu0 %v668
        %700 = vmatprep.subr.mxu0 0.0
        %701 = vmatpush1.msra.mxu0 %v667
        %702 = vmatprep.subr.mxu0 0.0
        %703 = vmatpush1.msra.mxu0 %v666
        %704 = vmatprep.subr.mxu0 0.0
        %705 = vmatpush1.msra.mxu0 %v665
        %706 = vmatprep.subr.mxu0 0.0
        %707 = vmatpush1.msra.mxu0 %v664
        %708 = vmatprep.subr.mxu0 0.0
        %709 = vmatpush1.msra.mxu0 %v663
        %710 = vmatprep.subr.mxu0 0.0
        %711 = vmatpush1.msra.mxu0 %v662
        %712 = vmatprep.subr.mxu0 0.0
        %713 = vmatpush1.msra.mxu0 %v661
        %714 = vmatprep.subr.mxu0 0.0
        %715 = vmatpush1.msra.mxu0 %v660
        %716 = vmatprep.subr.mxu0 0.0
        %717 = vmatpush1.msra.mxu0 %v659
        %718 = vmatprep.subr.mxu0 0.0
        %719 = vmatpush1.msra.mxu0 %v658
        %720 = vmatprep.subr.mxu0 0.0
        %721 = vmatpush1.msra.mxu0 %v657
        %722 = vmatprep.subr.mxu0 0.0
        %723 = vmatpush1.msra.mxu0 %v656
        %724 = vmatprep.subr.mxu0 0.0
        %725 = vmatpush1.msra.mxu0 %v655
        %726 = vmatprep.subr.mxu0 0.0
        %727 = vmatpush2.msra.mxu0 %v686
        %728 = vmatprep.subr.mxu0 0.0
        %729 = vmatpush2.msra.mxu0 %v685
        %730 = vmatprep.subr.mxu0 0.0
        %731 = vmatpush2.msra.mxu0 %v684
        %732 = vmatprep.subr.mxu0 0.0
        %733 = vmatpush2.msra.mxu0 %v683
        %734 = vmatprep.subr.mxu0 0.0
        %735 = vmatpush2.msra.mxu0 %v682
        %736 = vmatprep.subr.mxu0 0.0
        %737 = vmatpush2.msra.mxu0 %v681
        %738 = vmatprep.subr.mxu0 0.0
        %739 = vmatpush2.msra.mxu0 %v680
        %740 = vmatprep.subr.mxu0 0.0
        %741 = vmatpush2.msra.mxu0 %v679
        %742 = vmatprep.subr.mxu0 0.0
        %743 = vmatpush2.msra.mxu0 %v678
        %744 = vmatprep.subr.mxu0 0.0
        %745 = vmatpush2.msra.mxu0 %v677
        %746 = vmatprep.subr.mxu0 0.0
        %747 = vmatpush2.msra.mxu0 %v676
        %748 = vmatprep.subr.mxu0 0.0
        %749 = vmatpush2.msra.mxu0 %v675
        %750 = vmatprep.subr.mxu0 0.0
        %751 = vmatpush2.msra.mxu0 %v674
        %752 = vmatprep.subr.mxu0 0.0
        %753 = vmatpush2.msra.mxu0 %v673
        %754 = vmatprep.subr.mxu0 0.0
        %755 = vmatpush2.msra.mxu0 %v672
        %756 = vmatprep.subr.mxu0 0.0
        %757 = vmatpush2.msra.mxu0 %v671
        %758 = vmatprep.mubr.f32.mxu0 %v624
        %759 = vmatmul.mubr.f32.gmra.mxu0 %v623
        %v760 = vpop.f32.mrf.mxu0
        %v761 = vadd.f32 %v692, %v760
        %v762 = vpop.f32.mrf.mxu0
        %763 = vmatprep.mubr.f32.mxu0 %v626
        %764 = vmatmul.mubr.f32.gmra.mxu0 %v625
        %v765 = vpop.f32.mrf.mxu0
        %v766 = vadd.f32 %v692, %v765
        %v767 = vpop.f32.mrf.mxu0
        %768 = vmatprep.mubr.f32.mxu0 %v628
        %769 = vmatmul.mubr.f32.gmra.mxu0 %v627
        %v770 = vpop.f32.mrf.mxu0
        %v771 = vadd.f32 %v692, %v770
        %v772 = vpop.f32.mrf.mxu0
        %773 = vmatprep.mubr.f32.mxu0 %v630
        %774 = vmatmul.mubr.f32.gmra.mxu0 %v629
        %v775 = vpop.f32.mrf.mxu0
        %v776 = vadd.f32 %v692, %v775
        %v777 = vpop.f32.mrf.mxu0
        %778 = vmatprep.mubr.f32.mxu0 %v632
        %779 = vmatmul.mubr.f32.gmra.mxu0 %v631
        %v780 = vpop.f32.mrf.mxu0
        %v781 = vadd.f32 %v692, %v780
        %v782 = vpop.f32.mrf.mxu0
        %783 = vmatprep.mubr.f32.mxu0 %v634
        %784 = vmatmul.mubr.f32.gmra.mxu0 %v633
        %v785 = vpop.f32.mrf.mxu0
        %v786 = vadd.f32 %v692, %v785
        %v787 = vpop.f32.mrf.mxu0
        %788 = vmatprep.mubr.f32.mxu0 %v636
        %789 = vmatmul.mubr.f32.gmra.mxu0 %v635
        %v790 = vpop.f32.mrf.mxu0
        %v791 = vadd.f32 %v692, %v790
        %v792 = vpop.f32.mrf.mxu0
        %793 = vmatprep.mubr.f32.mxu0 %v638
        %794 = vmatmul.mubr.f32.gmra.mxu0 %v637
        %v795 = vpop.f32.mrf.mxu0
        %v796 = vadd.f32 %v692, %v795
        %v797 = vpop.f32.mrf.mxu0
        %798 = vmatprep.mubr.f32.mxu0 %v640
        %799 = vmatmul.mubr.f32.gmra.mxu0 %v639
        %v800 = vpop.f32.mrf.mxu0
        %v801 = vadd.f32 %v692, %v800
        %v802 = vpop.f32.mrf.mxu0
        %803 = vmatprep.mubr.f32.mxu0 %v642
        %804 = vmatmul.mubr.f32.gmra.mxu0 %v641
        %v805 = vpop.f32.mrf.mxu0
        %v806 = vadd.f32 %v692, %v805
        %v807 = vpop.f32.mrf.mxu0
        %808 = vmatprep.mubr.f32.mxu0 %v644
        %809 = vmatmul.mubr.f32.gmra.mxu0 %v643
        %v810 = vpop.f32.mrf.mxu0
        %v811 = vadd.f32 %v692, %v810
        %v812 = vpop.f32.mrf.mxu0
        %813 = vmatprep.mubr.f32.mxu0 %v646
        %814 = vmatmul.mubr.f32.gmra.mxu0 %v645
        %v815 = vpop.f32.mrf.mxu0
        %v816 = vadd.f32 %v692, %v815
        %v817 = vpop.f32.mrf.mxu0
        %818 = vmatprep.mubr.f32.mxu0 %v648
        %819 = vmatmul.mubr.f32.gmra.mxu0 %v647
        %v820 = vpop.f32.mrf.mxu0
        %v821 = vadd.f32 %v692, %v820
        %v822 = vpop.f32.mrf.mxu0
        %823 = vmatprep.mubr.f32.mxu0 %v650
        %824 = vmatmul.mubr.f32.gmra.mxu0 %v649
        %v825 = vpop.f32.mrf.mxu0
        %v826 = vadd.f32 %v692, %v825
        %v827 = vpop.f32.mrf.mxu0
        %828 = vmatprep.mubr.f32.mxu0 %v652
        %829 = vmatmul.mubr.f32.gmra.mxu0 %v651
        %v830 = vpop.f32.mrf.mxu0
        %v831 = vadd.f32 %v692, %v830
        %v832 = vpop.f32.mrf.mxu0
        %833 = vmatprep.mubr.f32.mxu0 %v654
        %834 = vmatmul.mubr.f32.gmra.mxu0 %v653
        %v835 = vpop.f32.mrf.mxu0
        %v836 = vadd.f32 %v692, %v835
        %v837 = vpop.f32.mrf.mxu0
        %838 = vdwg.mxu0
        %839 = vst [vmem:[%s271] sm:$0xff] %v761
        %840 = vst [vmem:[%s271 + $0x8] sm:$0xff] %v766
        %841 = vst [vmem:[%s271 + $0x10] sm:$0xff] %v771
        %842 = vst [vmem:[%s271 + $0x18] sm:$0xff] %v776
        %843 = vst [vmem:[%s271 + $0x20] sm:$0xff] %v781
        %844 = vst [vmem:[%s271 + $0x28] sm:$0xff] %v786
        %845 = vst [vmem:[%s271 + $0x30] sm:$0xff] %v791
        %846 = vst [vmem:[%s271 + $0x38] sm:$0xff] %v796
        %847 = vst [vmem:[%s271 + $0x40] sm:$0xff] %v801
        %848 = vst [vmem:[%s271 + $0x48] sm:$0xff] %v806
        %849 = vst [vmem:[%s271 + $0x50] sm:$0xff] %v811
        %850 = vst [vmem:[%s271 + $0x58] sm:$0xff] %v816
        %851 = vst [vmem:[%s271 + $0x60] sm:$0xff] %v821
        %852 = vst [vmem:[%s271 + $0x68] sm:$0xff] %v826
        %853 = vst [vmem:[%s271 + $0x70] sm:$0xff] %v831
        %854 = vst [vmem:[%s271 + $0x78] sm:$0xff] %v836
        %s855 = sand.u32 %s141, 1
        %s856 = scalar_lea.sflag [#allocation4], %s855
        %s857 = sand.u32 %s141, 1
        %s858 = smul.addr %s857, 128
        %s859 = scalar_lea.vmem [#allocation8], %s858
        // Predicated region
        $region53: #{tpu_custom_call.1} parent=39 // pred_check
          %p860 = pneg %p151
        $region54: #{tpu_custom_call.1} parent=39 // pred_check_branch
          %862 = sbr.rel (%p860) target = $region56
        $region55: #{tpu_custom_call.1} parent=39 // pred_region
          %s863 = smul.u32 16, %s23
          %s865 = ssub.s32 2048, 2048
          %866 = vsyncadd %s856, %s865
          %s867 = smul.addr %s863, 128
          %s868 = scalar_lea.hbm %s5, %s867
          %s869 = sshll.u32 %s859, 4
          %s870 = int_to_ptr.vmem [resolvable:$true] %s869
          %875 = dma.vmem_to_hbm [thread:$0]  %s870, 2048, %s868, %s856, 128, 128, 8
        $region56: #{tpu_custom_call.1} parent=39 // pred_fallthru
          _
      $region40: #{tpu_custom_call.1} parent=5 // pred_fallthru
        _
      %p876 = scmp.le.s32.totalorder 2, %s18
      // Predicated region
      $region57: #{tpu_custom_call.1} parent=5 // pred_check
        %p877 = pneg %p876
      $region58: #{tpu_custom_call.1} parent=5 // pred_check_branch
        %879 = sbr.rel (%p877) target = $region60
      $region59: #{tpu_custom_call.1} parent=5 // pred_region
        %s880 = ssub.s32 %s18, 2
        // Predicated region
        $region61: #{tpu_custom_call.1} parent=59 // pred_check
          %p881 = pneg %p157
        $region62: #{tpu_custom_call.1} parent=59 // pred_check_branch
          %883 = sbr.rel (%p881) target = $region64
        $region63: #{tpu_custom_call.1} parent=59 // pred_region
          %s884 = sand.u32 %s142, 1
          %s885 = scalar_lea.sflag [#allocation4], %s884
          %s886 = sand.u32 %s142, 1
          %s887 = smul.addr %s886, 128
          %s888 = scalar_lea.vmem [#allocation8], %s887
          %889 = dma.done %s885, 2048
        $region64: #{tpu_custom_call.1} parent=59 // pred_fallthru
          _
      $region60: #{tpu_custom_call.1} parent=5 // pred_fallthru
        _
    $region6: #{tpu_custom_call.1} parent=1 // loop_footer
      %s22 = sadd.s32 1, %s18
    $region7: #{tpu_custom_call.1} parent=1 // loop_footer_branch
      %17 = sbr.rel target = $region3
    $region8: #{tpu_custom_call.1} parent=1 // loop_exit
      _
    %890 = vsyncpa [#allocation3], 1
    %s891 = scalar_lea.sflag [#allocation3], 1
    %892 = vsyncpa %s891, 1
    %893 = vsyncpa [#allocation6], 1
    %894 = vsyncpa [#allocation4], 1
    %s895 = scalar_lea.sflag [#allocation4], 1
    %896 = vsyncpa %s895, 1

</llo_original>
